<compile_context>
chip_gen: v7x
topology: tpu7x:2x2x1
jax: 0.10.0
libtpu: 0.0.40
codegen_flags: <defaults>
</compile_context>

<pallas_src>
import functools
import math

import jax
import jax.numpy as jnp
from jax.experimental import pallas as pl
from jax.experimental.pallas import tpu as pltpu


def _round_up(x, m):
    return ((x + m - 1) // m) * m


def _pick_tile_s(s_pad, target):
    """Largest multiple of 8 that divides s_pad and is <= target."""
    cap = max(8, min((target // 8) * 8, s_pad))
    for t in range(cap, 7, -8):
        if s_pad % t == 0:
            return t
    return 8


# ---------------------------------------------------------------------------
# Kernel: one (batch b, seq tile t) grid step
# ---------------------------------------------------------------------------
def _moe_gate_kernel(x_ref, wt_ref, out_ref, part_ref=None, *,
                     top_k, norm_topk, n_experts, seq_len, tile_s,
                     skip_softmax, mask_tail):
    """
    x_ref   : (tile_s, D)    activations at native dtype (cast to bf16 here)
    wt_ref  : (D, e_pad)     bf16 pre-transposed + lane-padded gate weights
    out_ref : (tile_s, 128)  f32 packed: lanes [0,K)=weights, [K,2K)=ids
    part_ref: (8, e_pad)     per-(b,t) partial sum of softmax scores (aux only)
    """
    x = x_ref[...].astype(jnp.bfloat16)                    # VPU cast, hidden under DMA
    wt = wt_ref[...]

    # F.linear(x, W) == x @ W^T ; transpose / lane-pad hoisted to the wrapper.
    logits = jnp.dot(x, wt, preferred_element_type=jnp.float32)   # (TS, E_pad)
    ts, e_pad = logits.shape

    lane = jax.lax.broadcasted_iota(jnp.int32, (ts, e_pad), 1)
    logits = jnp.where(lane < n_experts, logits, -jnp.inf)        # kill padded lanes

    if skip_softmax:
        # norm_topk & no aux: softmax is monotone, select straight on logits,
        # renormalize over the K winners afterwards (mathematically identical).
        s = logits
        sentinel = -jnp.inf
    else:
        m = jnp.max(logits, axis=-1, keepdims=True)
        e = jnp.exp(logits - m)                                   # padded lanes -> 0
        denom = jnp.sum(e, axis=-1, keepdims=True)                # >= 1
        recip = 1.0 / denom                                       # exact, (TS,1): cheap
        s = e                                                     # same ordering as softmax
        sentinel = -1.0

    # iterative top-k (k is small & static): take max, record, mask out.
    vals, idxs = [], []
    for _ in range(top_k):
        v = jnp.max(s, axis=-1, keepdims=True)                    # (TS, 1)
        idx = jnp.min(jnp.where(s == v, lane, e_pad),
                      axis=-1, keepdims=True)                     # first occurrence
        vals.append(v)
        idxs.append(idx)
        s = jnp.where(lane == idx, sentinel, s)

    # per-k gate weights, (TS, 1) each (exact division for parity)
    if skip_softmax:
        exps = [jnp.exp(v - vals[0]) for v in vals]               # vals[0] is the max
        tot = exps[0]
        for ek in exps[1:]:
            tot = tot + ek
        w_list = [ek / tot for ek in exps]
    else:
        probs = [v * recip for v in vals]                         # softmax probs
        if top_k > 1 and norm_topk:
            tot = probs[0]
            for pk in probs[1:]:
                tot = tot + pk
            tot = tot + 1e-20
            w_list = [pk / tot for pk in probs]
        else:
            w_list = probs

    # lane-dense packed store: weights in lanes [0,K), expert ids in [K,2K).
    lane128 = jax.lax.broadcasted_iota(jnp.int32, (ts, 128), 1)
    packed = jnp.zeros((ts, 128), jnp.float32)
    for k in range(top_k):
        packed = jnp.where(lane128 == k, w_list[k], packed)
        packed = jnp.where(lane128 == top_k + k,
                           idxs[k].astype(jnp.float32), packed)
    out_ref[...] = packed

    # Tiny per-(batch, tile) partial sums of the softmax scores for the aux
    # loss: a sublane reduce (exact f32), no one-hot MXU matmul, no (N,E)
    # writeback.  Only emitted when the aux loss is actually needed.
    if part_ref is not None:
        scores = e * recip                                        # (TS, E_pad)
        if mask_tail:                                             # ragged seq tail
            t = pl.program_id(1)
            row = jax.lax.broadcasted_iota(jnp.int32, (ts, e_pad), 0) + t * tile_s
            scores = jnp.where(row < seq_len, scores, 0.0)
        part = jnp.sum(scores, axis=0, keepdims=True)             # (1, E_pad)
        part_ref[...] = jnp.broadcast_to(part, part_ref.shape)


# ---------------------------------------------------------------------------
# Wrapper: pallas_call + plain-JAX aux-loss glue
# ---------------------------------------------------------------------------
def moe_gate_forward(hidden_states, weights, *, top_k, norm_topk_experts,
                     aux_loss_alpha, seq_aux, training=True,
                     target_tile_tokens=None):
    B, S, D = hidden_states.shape
    E, D2 = weights.shape
    assert D == D2
    assert E >= top_k
    N = B * S

    need_aux = bool(training) and aux_loss_alpha > 0.0
    skip_softmax = (not need_aux) and norm_topk_experts and top_k > 1

    # expert (lane) axis padded to a multiple of 128 -> lane-dense MXU output.
    # (256-padding would fill v6e/v7x vmatmul pushes but doubles dead-lane
    #  softmax/top-k work; only worth it when MXU-bound, so keep 128.)
    e_pad = max(128, _round_up(E, 128))

    # ---- VMEM budget & token-tile selection (generation aware) -------------
    x_itemsize = jnp.dtype(hidden_states.dtype).itemsize
    try:
        vmem_cap = int(getattr(pltpu.get_tpu_info(), "vmem_capacity_bytes",
                               64 * 2 ** 20))
    except Exception:                        # interpret mode / CPU AOT etc.
        vmem_cap = 64 * 2 ** 20
    # v5e/v6e (128 MiB physical): ~100 MiB scoped; v7x (64 MiB): ~51 MiB.
    vmem_limit = max(32 * 2 ** 20, min(100 * 2 ** 20, int(vmem_cap * 0.8)))
    budget = vmem_limit // 2                 # headroom for compiler temporaries
    per_tok = (2 * D * x_itemsize            # x double buffer (native dtype)
               + 2 * 128 * 4                 # packed output double buffer
               + 6 * e_pad * 4)              # logits / exp / top-k working temps
    fixed = 2 * D * e_pad * 2 + 2 * 8 * e_pad * 4   # w_t buffers + part output
    if target_tile_tokens is None:
        target_tile_tokens = max(8, (budget - fixed) // per_tok)
    target_tile_tokens = int(min(max(target_tile_tokens, 8), 2048))

    s_pad = _round_up(S, 8)                  # only pads a ragged-8 tail
    tile_s = _pick_tile_s(s_pad, target_tile_tokens)
    num_s_tiles = s_pad // tile_s
    # keep both v7x TensorCores fed: at least 2 grid points when possible.
    if B * num_s_tiles < 2 and s_pad >= 16:
        tile_s = _pick_tile_s(s_pad, tile_s // 2)
        num_s_tiles = s_pad // tile_s

    x = hidden_states
    if s_pad != S:
        x = jnp.pad(x, ((0, 0), (0, s_pad - S), (0, 0)))

    # hoist the weight transpose + lane padding + bf16 cast out of the kernel.
    w_t = jnp.pad(weights.T.astype(jnp.bfloat16), ((0, 0), (0, e_pad - E)))

    kernel = functools.partial(
        _moe_gate_kernel, top_k=top_k, norm_topk=norm_topk_experts,
        n_experts=E, seq_len=S, tile_s=tile_s,
        skip_softmax=skip_softmax, mask_tail=(s_pad != S))

    out_shape = [jax.ShapeDtypeStruct((B, s_pad, 128), jnp.float32)]
    out_specs = [pl.BlockSpec((None, tile_s, 128), lambda b, t: (b, t, 0))]
    if need_aux:
        out_shape.append(
            jax.ShapeDtypeStruct((B, num_s_tiles, 8, e_pad), jnp.float32))
        out_specs.append(
            pl.BlockSpec((None, None, 8, e_pad), lambda b, t: (b, t, 0, 0)))

    outs = pl.pallas_call(
        kernel,
        out_shape=tuple(out_shape),
        grid_spec=pltpu.PrefetchScalarGridSpec(
            num_scalar_prefetch=0,
            grid=(B, num_s_tiles),
            in_specs=[
                # activations at native dtype; bf16 cast happens in-kernel.
                pl.BlockSpec((None, tile_s, D), lambda b, t: (b, t, 0)),
                # gate weights: constant block index -> effectively resident.
                # (pl.Buffered(1) would save one D*e_pad*2 B buffer; kept at
                #  the default buffering for portability.)
                pl.BlockSpec((D, e_pad), lambda b, t: (0, 0)),
            ],
            out_specs=tuple(out_specs)),
        compiler_params=pltpu.CompilerParams(
            dimension_semantics=("parallel", "parallel"),
            vmem_limit_bytes=int(vmem_limit)),
    )(x, w_t)

    if need_aux:
        packed, part_sums = outs
    else:
        (packed,) = outs

    packed = packed[:, :S, :]
    top_k_weights = packed[..., :top_k].reshape(N, top_k)
    top_k_idx = packed[..., top_k:2 * top_k].astype(jnp.int32).reshape(N, top_k)

    # ----- auxiliary load-balancing loss (training path), plain-JAX glue ----
    if need_aux:
        # per-batch sum over the sequence of the softmax scores, recovered
        # from the tiny per-tile partial sums (exact f32 accumulation).
        batch_score_sum = part_sums[:, :, 0, :E].sum(axis=1)          # (B, E)
        if seq_aux:
            # matches the module's forward(): ce is the raw one-hot count.
            ce = jax.nn.one_hot(top_k_idx.reshape(B, S * top_k), E,
                                dtype=jnp.float32).sum(axis=1)        # (B, E)
            aux_loss = ((ce * (batch_score_sum / S)).sum(axis=1).mean()
                        * aux_loss_alpha)
        else:
            ce = jax.nn.one_hot(top_k_idx.reshape(-1), E,
                                dtype=jnp.float32).mean(axis=0)       # (E,)
            Pi = batch_score_sum.sum(axis=0) / N
            fi = ce * E
            aux_loss = (Pi * fi).sum() * aux_loss_alpha
    else:
        aux_loss = jnp.float32(0.0)

    return top_k_idx, top_k_weights, aux_loss


# ---------------------------------------------------------------------------
# Demo / smoke test
# ---------------------------------------------------------------------------
if __name__ == "__main__":
    BATCH, SEQ, DIM = 2, 8, 32
    N_ROUTED_EXPERTS = 8
    TOP_K = 2
    NORM_TOPK = True
    SEQ_AUX = True
    ALPHA = 0.1

    key = jax.random.PRNGKey(0)
    k_x, k_w = jax.random.split(key)

    hidden_states = jax.random.normal(k_x, (BATCH, SEQ, DIM), dtype=jnp.float32)

    # kaiming_uniform_(a=sqrt(5)) on an (E, D) weight -> U(-1/sqrt(D), 1/sqrt(D))
    bound = 1.0 / math.sqrt(DIM)
    gate_weights = jax.random.uniform(
        k_w, (N_ROUTED_EXPERTS, DIM), minval=-bound, maxval=bound,
        dtype=jnp.float32)

    # pure-JAX reference softmax scores (f32) for a loose parity check
    ref_scores = jax.nn.softmax(
        hidden_states.reshape(-1, DIM) @ gate_weights.T, axis=-1)

    def check(idx, wgt, norm):
        assert idx.shape == (BATCH * SEQ, TOP_K)
        assert wgt.shape == (BATCH * SEQ, TOP_K)
        assert bool(jnp.all((idx >= 0) & (idx < N_ROUTED_EXPERTS)))
        sel = jnp.take_along_axis(ref_scores, idx, axis=-1)
        ref_w = sel / (sel.sum(-1, keepdims=True) + 1e-20) if norm else sel
        # bf16 MXU inputs -> loose tolerance
        assert bool(jnp.allclose(wgt, ref_w, atol=3e-2))

    # training path (full softmax + aux-loss partial sums)
    idx_t, wgt_t, aux_t = moe_gate_forward(
        hidden_states, gate_weights, top_k=TOP_K,
        norm_topk_experts=NORM_TOPK, aux_loss_alpha=ALPHA,
        seq_aux=SEQ_AUX, training=True)
    jax.block_until_ready((idx_t, wgt_t, aux_t))
    check(idx_t, wgt_t, NORM_TOPK)
    assert bool(jnp.isfinite(aux_t)) and float(aux_t) > 0.0

    # inference path (skips the full softmax, no aux loss)
    idx_i, wgt_i, aux_i = moe_gate_forward(
        hidden_states, gate_weights, top_k=TOP_K,
        norm_topk_experts=NORM_TOPK, aux_loss_alpha=ALPHA,
        seq_aux=SEQ_AUX, training=False)
    jax.block_until_ready((idx_i, wgt_i, aux_i))
    check(idx_i, wgt_i, NORM_TOPK)
    assert float(aux_i) == 0.0

    print("KERNEL_OK")
</pallas_src>

<mosaic_0001>
module attributes {stable_mosaic.version = 11 : i64} {
  func.func @_moe_gate_kernel(%arg0: i32, %arg1: i32, %arg2: memref<1x8x32xf32, #tpu.memory_space<vmem>>, %arg3: memref<32x128xbf16, #tpu.memory_space<vmem>>, %arg4: memref<1x8x128xf32, #tpu.memory_space<vmem>>, %arg5: memref<1x1x8x128xf32, #tpu.memory_space<vmem>>) attributes {dimension_semantics = [#tpu.dimension_semantics<parallel>, #tpu.dimension_semantics<parallel>], iteration_bounds = array<i64: 2, 1>, scalar_prefetch = 0 : i64, scratch_operands = 0 : i64, tpu.core_type = #tpu.core_type<tc>, window_params = [{transform_indices = @transform_0, window_bounds = array<i64: 1, 8, 32>}, {pipeline_mode = #tpu.pipeline_mode<synchronous>, transform_indices = @transform_1, window_bounds = array<i64: 32, 128>}, {transform_indices = @transform_2, window_bounds = array<i64: 1, 8, 128>}, {transform_indices = @transform_3, window_bounds = array<i64: 1, 1, 8, 128>}]} {
    %c0 = arith.constant 0 : index
    %c0_0 = arith.constant 0 : index
    %c0_1 = arith.constant 0 : index
    %0 = vector.load %arg2[%c0, %c0_0, %c0_1] : memref<1x8x32xf32, #tpu.memory_space<vmem>>, vector<1x8x32xf32>
    %1 = vector.shape_cast %0 : vector<1x8x32xf32> to vector<8x32xf32>
    %2 = arith.truncf %1 : vector<8x32xf32> to vector<8x32xbf16>
    %c0_2 = arith.constant 0 : index
    %c0_3 = arith.constant 0 : index
    %3 = vector.load %arg3[%c0_2, %c0_3] : memref<32x128xbf16, #tpu.memory_space<vmem>>, vector<32x128xbf16>
    %cst = arith.constant dense<0.000000e+00> : vector<8x128xf32>
    %4 = tpu.matmul %2, %3, %cst {dimension_numbers = #tpu.dot_dimension_numbers<[1], [0], [0], [1], [0, 0, 1, 1], [], []>} : vector<8x32xbf16>, vector<32x128xbf16>, vector<8x128xf32> -> vector<8x128xf32>
    %5 = tpu.iota {dimensions = array<i32: 1>} : vector<8x128xi32>
    %c8_i32 = arith.constant 8 : i32
    %6 = vector.broadcast %c8_i32 : i32 to vector<8x128xi32>
    %7 = arith.cmpi slt, %5, %6 : vector<8x128xi32>
    %cst_4 = arith.constant 0xFF800000 : f32
    %8 = vector.broadcast %cst_4 : f32 to vector<8x128xf32>
    %9 = arith.select %7, %4, %8 : vector<8x128xi1>, vector<8x128xf32>
    %cst_5 = arith.constant dense<0xFF800000> : vector<8xf32>
    %10 = vector.multi_reduction <maximumf>, %9, %cst_5 [1] : vector<8x128xf32> to vector<8xf32>
    %11 = vector.shape_cast %10 : vector<8xf32> to vector<8x1xf32>
    %12 = vector.broadcast %11 : vector<8x1xf32> to vector<8x128xf32>
    %13 = arith.subf %9, %12 : vector<8x128xf32>
    %14 = math.exp %13 : vector<8x128xf32>
    %cst_6 = arith.constant dense<0.000000e+00> : vector<8xf32>
    %15 = vector.multi_reduction <add>, %14, %cst_6 [1] : vector<8x128xf32> to vector<8xf32>
    %16 = vector.shape_cast %15 : vector<8xf32> to vector<8x1xf32>
    %cst_7 = arith.constant 1.000000e+00 : f32
    %17 = vector.broadcast %cst_7 : f32 to vector<8x1xf32>
    %18 = arith.divf %17, %16 : vector<8x1xf32>
    %cst_8 = arith.constant dense<0xFF800000> : vector<8xf32>
    %19 = vector.multi_reduction <maximumf>, %14, %cst_8 [1] : vector<8x128xf32> to vector<8xf32>
    %20 = vector.shape_cast %19 : vector<8xf32> to vector<8x1xf32>
    %21 = vector.broadcast %20 : vector<8x1xf32> to vector<8x128xf32>
    %22 = arith.cmpf oeq, %14, %21 : vector<8x128xf32>
    %c128_i32 = arith.constant 128 : i32
    %23 = vector.broadcast %c128_i32 : i32 to vector<8x128xi32>
    %24 = arith.select %22, %5, %23 : vector<8x128xi1>, vector<8x128xi32>
    %cst_9 = arith.constant dense<2147483647> : vector<8xi32>
    %25 = vector.multi_reduction <minsi>, %24, %cst_9 [1] : vector<8x128xi32> to vector<8xi32>
    %26 = vector.shape_cast %25 : vector<8xi32> to vector<8x1xi32>
    %27 = vector.broadcast %26 : vector<8x1xi32> to vector<8x128xi32>
    %28 = arith.cmpi eq, %5, %27 : vector<8x128xi32>
    %cst_10 = arith.constant -1.000000e+00 : f32
    %29 = vector.broadcast %cst_10 : f32 to vector<8x128xf32>
    %30 = arith.select %28, %29, %14 : vector<8x128xi1>, vector<8x128xf32>
    %cst_11 = arith.constant dense<0xFF800000> : vector<8xf32>
    %31 = vector.multi_reduction <maximumf>, %30, %cst_11 [1] : vector<8x128xf32> to vector<8xf32>
    %32 = vector.shape_cast %31 : vector<8xf32> to vector<8x1xf32>
    %33 = vector.broadcast %32 : vector<8x1xf32> to vector<8x128xf32>
    %34 = arith.cmpf oeq, %30, %33 : vector<8x128xf32>
    %c128_i32_12 = arith.constant 128 : i32
    %35 = vector.broadcast %c128_i32_12 : i32 to vector<8x128xi32>
    %36 = arith.select %34, %5, %35 : vector<8x128xi1>, vector<8x128xi32>
    %cst_13 = arith.constant dense<2147483647> : vector<8xi32>
    %37 = vector.multi_reduction <minsi>, %36, %cst_13 [1] : vector<8x128xi32> to vector<8xi32>
    %38 = vector.shape_cast %37 : vector<8xi32> to vector<8x1xi32>
    %39 = arith.mulf %20, %18 : vector<8x1xf32>
    %40 = arith.mulf %32, %18 : vector<8x1xf32>
    %41 = arith.addf %39, %40 : vector<8x1xf32>
    %cst_14 = arith.constant 9.99999968E-21 : f32
    %42 = vector.broadcast %cst_14 : f32 to vector<8x1xf32>
    %43 = arith.addf %41, %42 : vector<8x1xf32>
    %44 = arith.divf %39, %43 : vector<8x1xf32>
    %45 = arith.divf %40, %43 : vector<8x1xf32>
    %46 = tpu.iota {dimensions = array<i32: 1>} : vector<8x128xi32>
    %cst_15 = arith.constant 0.000000e+00 : f32
    %47 = vector.broadcast %cst_15 : f32 to vector<8x128xf32>
    %c0_i32 = arith.constant 0 : i32
    %48 = vector.broadcast %c0_i32 : i32 to vector<8x128xi32>
    %49 = arith.cmpi eq, %46, %48 : vector<8x128xi32>
    %50 = vector.shape_cast %44 : vector<8x1xf32> to vector<8x1xf32>
    %51 = vector.broadcast %50 : vector<8x1xf32> to vector<8x128xf32>
    %52 = arith.select %49, %51, %47 : vector<8x128xi1>, vector<8x128xf32>
    %c2_i32 = arith.constant 2 : i32
    %53 = vector.broadcast %c2_i32 : i32 to vector<8x128xi32>
    %54 = arith.cmpi eq, %46, %53 : vector<8x128xi32>
    %55 = arith.sitofp %26 : vector<8x1xi32> to vector<8x1xf32>
    %56 = vector.shape_cast %55 : vector<8x1xf32> to vector<8x1xf32>
    %57 = vector.broadcast %56 : vector<8x1xf32> to vector<8x128xf32>
    %58 = arith.select %54, %57, %52 : vector<8x128xi1>, vector<8x128xf32>
    %c1_i32 = arith.constant 1 : i32
    %59 = vector.broadcast %c1_i32 : i32 to vector<8x128xi32>
    %60 = arith.cmpi eq, %46, %59 : vector<8x128xi32>
    %61 = vector.shape_cast %45 : vector<8x1xf32> to vector<8x1xf32>
    %62 = vector.broadcast %61 : vector<8x1xf32> to vector<8x128xf32>
    %63 = arith.select %60, %62, %58 : vector<8x128xi1>, vector<8x128xf32>
    %c3_i32 = arith.constant 3 : i32
    %64 = vector.broadcast %c3_i32 : i32 to vector<8x128xi32>
    %65 = arith.cmpi eq, %46, %64 : vector<8x128xi32>
    %66 = arith.sitofp %38 : vector<8x1xi32> to vector<8x1xf32>
    %67 = vector.shape_cast %66 : vector<8x1xf32> to vector<8x1xf32>
    %68 = vector.broadcast %67 : vector<8x1xf32> to vector<8x128xf32>
    %69 = arith.select %65, %68, %63 : vector<8x128xi1>, vector<8x128xf32>
    %c0_16 = arith.constant 0 : index
    %c0_17 = arith.constant 0 : index
    %c0_18 = arith.constant 0 : index
    %70 = vector.load %arg4[%c0_16, %c0_17, %c0_18] : memref<1x8x128xf32, #tpu.memory_space<vmem>>, vector<1x8x128xf32>
    %71 = vector.shape_cast %70 : vector<1x8x128xf32> to vector<8x128xf32>
    %72 = vector.shape_cast %69 : vector<8x128xf32> to vector<1x8x128xf32>
    tpu.vector_store %arg4[%c0_16, %c0_17, %c0_18], %72 {strides = array<i32>} : memref<1x8x128xf32, #tpu.memory_space<vmem>>, vector<1x8x128xf32>,
    %73 = vector.broadcast %18 : vector<8x1xf32> to vector<8x128xf32>
    %74 = arith.mulf %14, %73 : vector<8x128xf32>
    %cst_19 = arith.constant dense<0.000000e+00> : vector<128xf32>
    %75 = vector.multi_reduction <add>, %74, %cst_19 [0] : vector<8x128xf32> to vector<128xf32>
    %76 = vector.shape_cast %75 : vector<128xf32> to vector<1x128xf32>
    %77 = vector.shape_cast %76 : vector<1x128xf32> to vector<1x128xf32>
    %78 = vector.broadcast %77 : vector<1x128xf32> to vector<8x128xf32>
    %c0_20 = arith.constant 0 : index
    %c0_21 = arith.constant 0 : index
    %c0_22 = arith.constant 0 : index
    %c0_23 = arith.constant 0 : index
    %79 = vector.load %arg5[%c0_20, %c0_21, %c0_22, %c0_23] : memref<1x1x8x128xf32, #tpu.memory_space<vmem>>, vector<1x1x8x128xf32>
    %80 = vector.shape_cast %79 : vector<1x1x8x128xf32> to vector<8x128xf32>
    %81 = vector.shape_cast %78 : vector<8x128xf32> to vector<1x1x8x128xf32>
    tpu.vector_store %arg5[%c0_20, %c0_21, %c0_22, %c0_23], %81 {strides = array<i32>} : memref<1x1x8x128xf32, #tpu.memory_space<vmem>>, vector<1x1x8x128xf32>,
    return
  }
  func.func @transform_0(%arg0: i32, %arg1: i32) -> (i32, i32, i32) {
    %c0_i32 = arith.constant 0 : i32
    %c0_i32_0 = arith.constant 0 : i32
    return %arg0, %arg1, %c0_i32 : i32, i32, i32
  }
  func.func @transform_1(%arg0: i32, %arg1: i32) -> (i32, i32) {
    %c0_i32 = arith.constant 0 : i32
    %c0_i32_0 = arith.constant 0 : i32
    %c0_i32_1 = arith.constant 0 : i32
    return %c0_i32, %c0_i32_0 : i32, i32
  }
  func.func @transform_2(%arg0: i32, %arg1: i32) -> (i32, i32, i32) {
    %c0_i32 = arith.constant 0 : i32
    %c0_i32_0 = arith.constant 0 : i32
    return %arg0, %arg1, %c0_i32 : i32, i32, i32
  }
  func.func @transform_3(%arg0: i32, %arg1: i32) -> (i32, i32, i32, i32) {
    %c0_i32 = arith.constant 0 : i32
    %c0_i32_0 = arith.constant 0 : i32
    %c0_i32_1 = arith.constant 0 : i32
    return %arg0, %arg1, %c0_i32, %c0_i32_0 : i32, i32, i32, i32
  }
}

</mosaic_0001>

<llo_original>
// kernel: tpu_custom_call.1
$region0: #{tpu_custom_call.1}
  #allocation0 [shape = 'u32[]', space=smem, size = 0x4, offset = 0x4, fixed_abs, tag = 'smem constant byte address 0x4 - core index']
  #allocation1 [shape = 'u32[144,128]{1,0:T(1,128)}', space=vmem, size = 0x12000, scoped, tag = 'internal scratch']
  %s0 = inlined_call_operand.hbm [shape: f32[2,8,32], index: 0, kind: input, shape index: {}]
  %s1 = inlined_call_operand.hbm [shape: bf16[32,128], index: 1, kind: input, shape index: {}]
  %s2 = inlined_call_operand.hbm [shape: f32[2,8,128], index: 2, kind: output, shape index: {0}]
  %s3 = inlined_call_operand.hbm [shape: f32[2,1,8,128], index: 3, kind: output, shape index: {1}]
  %4 = xla_tuple %s2, %s3
  %s5 = sld [smem:[#allocation0]]
  $region57: #{tpu_custom_call.1} parent=0
    _
  %s7 = ssub.s32 1, %s5
  %s8 = scalar_select 0, %s7, %s5
  $region1: #{tpu_custom_call.1} parent=0
    #allocation2 [shape = 'u8[8192]{0}', space=vmem, size = 0x2000, scoped, tag = 'input window, operand 0']
    #allocation3 [shape = 's32[2]{0}', space=sflag, size = 0x8, scoped, tag = 'scoped memory for tpu_custom_call.1']
    #allocation4 [shape = 's32[2]{0}', space=sflag, size = 0x8, scoped, tag = 'scoped memory for tpu_custom_call.1']
    #allocation5 [shape = 'u8[8192]{0}', space=vmem, size = 0x2000, scoped, tag = 'input window, operand 1, single buffered']
    #allocation6 [shape = 's32[1]{0}', space=sflag, size = 0x4, scoped, tag = 'scoped memory for tpu_custom_call.1']
    #allocation7 [shape = 'u8[8192]{0}', space=vmem, size = 0x2000, scoped, tag = 'output window, operand 0']
    #allocation8 [shape = 'u8[8192]{0}', space=vmem, size = 0x2000, scoped, tag = 'output window, operand 1']
    #allocation9 [shape = 's32[2]{0}', space=sflag, size = 0x8, scoped, tag = 'scoped memory for tpu_custom_call.1']
    %9 = vsyncpa [#allocation3], 0
    %s10 = scalar_lea.sflag [#allocation3], 1
    %11 = vsyncpa %s10, 0
    %12 = vsyncpa [#allocation6], 0
    %13 = vsyncpa [#allocation4], 0
    %s14 = scalar_lea.sflag [#allocation4], 1
    %15 = vsyncpa %s14, 0
    %16 = vsyncpa [#allocation9], 0
    %s17 = scalar_lea.sflag [#allocation9], 1
    %18 = vsyncpa %s17, 0
    loop: start=0, step=1, limit=4
    $region2: #{tpu_custom_call.1} parent=1 // loop_pre_header
      _
    $region3: #{tpu_custom_call.1} parent=1 // loop_header
      %s20 = sphi 0, %s24
      %p21 = scmp.ge.s32.totalorder %s20, 4
      %s27 = sphi 0, %s39
      %s28 = sphi 0, %s35
      %s29 = sphi 0, %s27
      %s30 = sphi 0, %s28
      %s31 = sphi 0, %s29
      %s32 = sphi 0, %s30
      %s44 = sphi 0, %s46
      %s47 = sphi 0, %s44
      %s48 = sphi 0, %s47
      %s64 = sphi 0, %s48
      %s68 = sphi 0, %s68
      %s70 = sphi 0, %s68
      %s71 = sphi 0, %s70
      %s85 = sphi 0, %s71
      %s93 = sphi 0, %s95
      %s96 = sphi 0, %s93
      %s97 = sphi 0, %s96
      %s113 = sphi 0, %s97
      %s121 = sphi 0, %s123
      %s124 = sphi 0, %s121
      %s125 = sphi 0, %s124
      %s141 = sphi 0, %s125
    $region4: #{tpu_custom_call.1} parent=1 // loop_header_branch
      %23 = sbr.rel (%p21) target = $region8
    $region5: #{tpu_custom_call.1} parent=1 // loop_body
      %s25 = ssub.s32 %s20, 1
      %s26 = ssub.s32 %s20, 2
      %s33 = sadd.s32 1, %s28
      %p34 = scmp.ge.s32.totalorder %s33, 1
      %s35 = scalar_select %p34, 0, %s33
      %s36 = sadd.s32 1, %s27
      %s37 = scalar_select %p34, %s36, %s27
      %p38 = scmp.ge.s32.totalorder %s37, 2
      %s39 = scalar_select %p38, 0, %s37
      %s40 = ssub.s32 %s27, %s39
      %s41 = ssub.s32 %s28, %s35
      %s42 = sor.u32 %s40, %s41
      %p43 = scmp.eq.s32.totalorder %s42, 0
      %s45 = sadd.s32 %s44, 1
      %s46 = scalar_select %p43, %s44, %s45
      %p49 = pneg %p43
      %p50 = scmp.eq.s32.totalorder %s20, 1
      %p51 = por %p49, %p50
      %p52 = scmp.ne.s32.totalorder %s44, %s47
      %p53 = scmp.eq.s32.totalorder %s20, 0
      %p54 = por %p52, %p53
      %p55 = scmp.ne.s32.totalorder %s44, %s47
      %p56 = scmp.eq.s32.totalorder %s25, 1
      %p57 = por %p55, %p56
      %p58 = scmp.ne.s32.totalorder %s47, %s48
      %p59 = scmp.eq.s32.totalorder %s25, 0
      %p60 = por %p58, %p59
      %p61 = scmp.ne.s32.totalorder %s47, %s48
      %p62 = scmp.eq.s32.totalorder %s26, 1
      %p63 = por %p61, %p62
      %p65 = scmp.ne.s32.totalorder %s48, %s64
      %p66 = scmp.eq.s32.totalorder %s26, 0
      %p67 = por %p65, %p66
      %s69 = sadd.s32 %s68, 1
      %p72 = scmp.eq.s32.totalorder %s20, 1
      %p73 = scmp.ne.s32.totalorder %s68, %s70
      %p74 = scmp.eq.s32.totalorder %s20, 0
      %p75 = por %p73, %p74
      %p76 = scmp.ne.s32.totalorder %s68, %s70
      %p77 = scmp.eq.s32.totalorder %s25, 1
      %p78 = por %p76, %p77
      %p79 = scmp.ne.s32.totalorder %s70, %s71
      %p80 = scmp.eq.s32.totalorder %s25, 0
      %p81 = por %p79, %p80
      %p82 = scmp.ne.s32.totalorder %s70, %s71
      %p83 = scmp.eq.s32.totalorder %s26, 1
      %p84 = por %p82, %p83
      %p86 = scmp.ne.s32.totalorder %s71, %s85
      %p87 = scmp.eq.s32.totalorder %s26, 0
      %p88 = por %p86, %p87
      %s89 = ssub.s32 %s27, %s39
      %s90 = ssub.s32 %s28, %s35
      %s91 = sor.u32 %s89, %s90
      %p92 = scmp.eq.s32.totalorder %s91, 0
      %s94 = sadd.s32 %s93, 1
      %s95 = scalar_select %p92, %s93, %s94
      %p98 = pneg %p92
      %p99 = scmp.eq.s32.totalorder %s20, 1
      %p100 = por %p98, %p99
      %p101 = scmp.ne.s32.totalorder %s93, %s96
      %p102 = scmp.eq.s32.totalorder %s20, 0
      %p103 = por %p101, %p102
      %p104 = scmp.ne.s32.totalorder %s93, %s96
      %p105 = scmp.eq.s32.totalorder %s25, 1
      %p106 = por %p104, %p105
      %p107 = scmp.ne.s32.totalorder %s96, %s97
      %p108 = scmp.eq.s32.totalorder %s25, 0
      %p109 = por %p107, %p108
      %p110 = scmp.ne.s32.totalorder %s96, %s97
      %p111 = scmp.eq.s32.totalorder %s26, 1
      %p112 = por %p110, %p111
      %p114 = scmp.ne.s32.totalorder %s97, %s113
      %p115 = scmp.eq.s32.totalorder %s26, 0
      %p116 = por %p114, %p115
      %s117 = ssub.s32 %s27, %s39
      %s118 = ssub.s32 %s28, %s35
      %s119 = sor.u32 %s117, %s118
      %p120 = scmp.eq.s32.totalorder %s119, 0
      %s122 = sadd.s32 %s121, 1
      %s123 = scalar_select %p120, %s121, %s122
      %p126 = pneg %p120
      %p127 = scmp.eq.s32.totalorder %s20, 1
      %p128 = por %p126, %p127
      %p129 = scmp.ne.s32.totalorder %s121, %s124
      %p130 = scmp.eq.s32.totalorder %s20, 0
      %p131 = por %p129, %p130
      %p132 = scmp.ne.s32.totalorder %s121, %s124
      %p133 = scmp.eq.s32.totalorder %s25, 1
      %p134 = por %p132, %p133
      %p135 = scmp.ne.s32.totalorder %s124, %s125
      %p136 = scmp.eq.s32.totalorder %s25, 0
      %p137 = por %p135, %p136
      %p138 = scmp.ne.s32.totalorder %s124, %s125
      %p139 = scmp.eq.s32.totalorder %s26, 1
      %p140 = por %p138, %p139
      %p142 = scmp.ne.s32.totalorder %s125, %s141
      %p143 = scmp.eq.s32.totalorder %s26, 0
      %p144 = por %p142, %p143
      %p145 = scmp.le.s32.totalorder 1, %s20
      %p146 = scmp.lt.s32.totalorder %s20, 3
      %p147 = pnand %p145, %p146
      %p148 = pneg %p147
      // Predicated region
      $region9: #{tpu_custom_call.1} parent=5 // pred_check
        _
      $region10: #{tpu_custom_call.1} parent=5 // pred_check_branch
        %150 = sbr.rel (%p147) target = $region12
      $region11: #{tpu_custom_call.1} parent=5 // pred_region
        %s151 = ssub.s32 %s20, 1
        // Predicated region
        $region13: #{tpu_custom_call.1} parent=11 // pred_check
          %p152 = pneg %p81
        $region14: #{tpu_custom_call.1} parent=11 // pred_check_branch
          %154 = sbr.rel (%p152) target = $region16
        $region15: #{tpu_custom_call.1} parent=11 // pred_region
          %s156 = ssub.s32 256, 256
          %157 = vsyncadd [#allocation6], %s156
          %s158 = sshll.u32 [#allocation5], 4
          %s159 = int_to_ptr.vmem [resolvable:$true] %s158
          %164 = dma.hbm_to_vmem [thread:$0]  %s1, 256, %s159, [#allocation6], 64, 64, 4
        $region16: #{tpu_custom_call.1} parent=11 // pred_fallthru
          _
      $region12: #{tpu_custom_call.1} parent=5 // pred_fallthru
        _
      %p165 = scmp.lt.s32.totalorder %s20, 2
      // Predicated region
      $region17: #{tpu_custom_call.1} parent=5 // pred_check
        %p166 = pneg %p165
      $region18: #{tpu_custom_call.1} parent=5 // pred_check_branch
        %168 = sbr.rel (%p166) target = $region20
      $region19: #{tpu_custom_call.1} parent=5 // pred_region
        // Predicated region
        $region21: #{tpu_custom_call.1} parent=19 // pred_check
          %p169 = pneg %p54
        $region22: #{tpu_custom_call.1} parent=19 // pred_check_branch
          %171 = sbr.rel (%p169) target = $region24
        $region23: #{tpu_custom_call.1} parent=19 // pred_region
          %s172 = sand.u32 %s44, 1
          %s173 = scalar_lea.sflag [#allocation3], %s172
          %s174 = sand.u32 %s44, 1
          %s175 = smul.addr %s174, 8
          %s176 = scalar_lea.vmem [#allocation2], %s175
          %s178 = ssub.s32 128, 128
          %179 = vsyncadd %s173, %s178
          %s180 = sadd.s32 %s28, %s27
          %s181 = smul.addr %s180, 128
          %s182 = scalar_lea.hbm %s0, %s181
          %s184 = sshll.u32 %s176, 4
          %s185 = int_to_ptr.vmem [resolvable:$true] %s184
          %187 = dma.hbm_to_vmem [thread:$0]  %s182, 128, %s185, %s173
        $region24: #{tpu_custom_call.1} parent=19 // pred_fallthru
          _
      $region20: #{tpu_custom_call.1} parent=5 // pred_fallthru
        _
      %p188 = scmp.le.s32.totalorder 1, %s20
      %p189 = scmp.lt.s32.totalorder %s20, 3
      %p190 = pnand %p188, %p189
      %p191 = pneg %p190
      // Predicated region
      $region25: #{tpu_custom_call.1} parent=5 // pred_check
        _
      $region26: #{tpu_custom_call.1} parent=5 // pred_check_branch
        %193 = sbr.rel (%p190) target = $region28
      $region27: #{tpu_custom_call.1} parent=5 // pred_region
        %s194 = ssub.s32 %s20, 1
        %s195 = sand.u32 %s47, 1
        %s196 = scalar_lea.sflag [#allocation3], %s195
        %s197 = sand.u32 %s47, 1
        %s198 = smul.addr %s197, 8
        %s199 = scalar_lea.vmem [#allocation2], %s198
        // Predicated region
        $region29: #{tpu_custom_call.1} parent=27 // pred_check
          %p200 = pneg %p60
        $region30: #{tpu_custom_call.1} parent=27 // pred_check_branch
          %202 = sbr.rel (%p200) target = $region32
        $region31: #{tpu_custom_call.1} parent=27 // pred_region
          %203 = dma.done %s196, 128
        $region32: #{tpu_custom_call.1} parent=27 // pred_fallthru
          _
        // Predicated region
        $region33: #{tpu_custom_call.1} parent=27 // pred_check
          %p204 = pneg %p81
        $region34: #{tpu_custom_call.1} parent=27 // pred_check_branch
          %206 = sbr.rel (%p204) target = $region36
        $region35: #{tpu_custom_call.1} parent=27 // pred_region
          %207 = dma.done [#allocation6], 256
        $region36: #{tpu_custom_call.1} parent=27 // pred_fallthru
          _
        %s208 = sand.u32 %s47, 1
        %s209 = scalar_lea.sflag [#allocation3], %s208
        %s210 = sand.u32 %s47, 1
        %s211 = smul.addr %s210, 8
        %s212 = scalar_lea.vmem [#allocation2], %s211
        %p213 = pneg %p60
        %p214 = pneg %p57
        %p215 = pneg %p81
        %p216 = pneg %p78
        %p217 = pneg %p109
        %p218 = pneg %p106
        %s219 = sand.u32 %s96, 1
        %s220 = scalar_lea.sflag [#allocation4], %s219
        %s221 = sand.u32 %s96, 1
        %s222 = smul.addr %s221, 8
        %s223 = scalar_lea.vmem [#allocation7], %s222
        %p224 = pneg %p137
        %p225 = pneg %p134
        %s226 = sand.u32 %s124, 1
        %s227 = scalar_lea.sflag [#allocation9], %s226
        %s228 = sand.u32 %s124, 1
        %s229 = smul.addr %s228, 8
        %s230 = scalar_lea.vmem [#allocation8], %s229
        %v232 = vld [vmem:[%s199] sm:$0xff]
        %v233 = vpack.c.bf16 %v232, %v232
        %v234 = vld [vmem:[#allocation5] sm:$0xf]
        %v235 = vld [vmem:[#allocation5 + $0x4] sm:$0xf]
        %v236 = vld [vmem:[#allocation5 + $0x8] sm:$0xf]
        %v237 = vld [vmem:[#allocation5 + $0xc] sm:$0xf]
        %v242 = vunpack.c.l.b16 %v234
        %v243 = vunpack.c.l.b16 %v235
        %v244 = vunpack.c.l.b16 %v236
        %v245 = vunpack.c.l.b16 %v237
        %v246 = vpack.c.b16 %v243, %v242
        %v247 = vpack.c.b16 %v245, %v244
        %vm250 = vcmask 261120
        %v252 = vsel %vm250, %v233, 0
        %254 = vmatprep.subr.bf16.mxu0 0
        %255 = vmatpush1.bf16.msra.mxu0 %v246
        %256 = vmatprep.subr.bf16.mxu0 0
        %257 = vmatpush1.bf16.msra.mxu0 %v247
        %258 = vmatprep.subr.bf16.mxu0 0
        %259 = vmatpush1.bf16.msra.mxu0 0
        %260 = vmatprep.subr.bf16.mxu0 0
        %261 = vmatpush1.bf16.msra.mxu0 0
        %262 = vmatprep.subr.bf16.mxu0 0
        %263 = vmatpush1.bf16.msra.mxu0 0
        %264 = vmatprep.subr.bf16.mxu0 0
        %265 = vmatpush1.bf16.msra.mxu0 0
        %266 = vmatprep.subr.bf16.mxu0 0
        %267 = vmatpush1.bf16.msra.mxu0 0
        %268 = vmatprep.subr.bf16.mxu0 0
        %269 = vmatpush1.bf16.msra.mxu0 0
        %270 = vmatprep.subr.bf16.mxu0 0
        %271 = vmatpush1.bf16.msra.mxu0 0
        %272 = vmatprep.subr.bf16.mxu0 0
        %273 = vmatpush1.bf16.msra.mxu0 0
        %274 = vmatprep.subr.bf16.mxu0 0
        %275 = vmatpush1.bf16.msra.mxu0 0
        %276 = vmatprep.subr.bf16.mxu0 0
        %277 = vmatpush1.bf16.msra.mxu0 0
        %278 = vmatprep.subr.bf16.mxu0 0
        %279 = vmatpush1.bf16.msra.mxu0 0
        %280 = vmatprep.subr.bf16.mxu0 0
        %281 = vmatpush1.bf16.msra.mxu0 0
        %282 = vmatprep.subr.bf16.mxu0 0
        %283 = vmatpush1.bf16.msra.mxu0 0
        %284 = vmatprep.subr.bf16.mxu0 0
        %285 = vmatpush1.bf16.msra.mxu0 0
        %286 = vmatprep.mubr.bf16.mxu0 0
        %287 = vmatmul.mubr.bf16.gmra.mrb[0].mxu0 %v252
        %v288 = vpop.f32.mrb[0].mxu0
        %v289 = vadd.f32 0.0, %v288
        %v290 = vpop.f32.mrb[0].mxu0
        %v291 = vpop.f32.mrb[0].mxu0
        %v292 = vpop.f32.mrb[0].mxu0
        %293 = vdwg.mxu0
        %v294 = vlaneseq
        %v295 = vand.u32 %v294, 127
        %vm296 = vcmp.lt.s32.totalorder %v295, 8
        %v297 = vsel %vm296, %v289, -inf
        %298 = vmax.xlane.f32.xlu0 %v297
        %v299 = vpop.xlane.xlu0 %298
        %v300 = vsub.f32 %v297, %v299
        %v301 = vmul.f32 %v300, 1.442695
        %v302 = vpow.pop %v301
        %303 = vadd.xlane.f32.xlu0 %v302
        %v304 = vpop.xlane.xlu0 %303
        %v305 = vrcp.pop %v304
        %v306 = vmul.f32 1.0, %v305
        %307 = vmax.xlane.f32.xlu0 %v302
        %v308 = vpop.xlane.xlu0 %307
        %vm309 = vcmp.eq.f32.partialorder %v302, %v308
        %v310 = vsel %vm309, %v295, 128
        %v311 = vand.u32 %v310, 65535
        %v312 = vshra.s32 %v310, 16
        %v313 = vcvt.s32.f32 %v311
        %v314 = vcvt.s32.f32 %v312
        %315 = vmin.xlane.f32.xlu0 %v314
        %v316 = vpop.xlane.xlu0 %315
        %vm317 = vcmp.eq.f32.partialorder %v314, %v316
        %v318 = vsel %vm317, %v313, inf
        %319 = vmin.xlane.f32.xlu0 %v318
        %v320 = vpop.xlane.xlu0 %319
        %v321 = vcvt.f32.s32 %v320
        %v322 = vcvt.f32.s32 %v316
        %v323 = vshll.u32 %v322, 16
        %v324 = vadd.s32 %v323, %v321
        %vm325 = vcmp.eq.s32.totalorder %v295, %v324
        %v326 = vsel %vm325, -1.0, %v302
        %327 = vmax.xlane.f32.xlu0 %v326
        %v328 = vpop.xlane.xlu0 %327
        %vm329 = vcmp.eq.f32.partialorder %v326, %v328
        %v330 = vsel %vm329, %v295, 128
        %v331 = vand.u32 %v330, 65535
        %v332 = vshra.s32 %v330, 16
        %v333 = vcvt.s32.f32 %v331
        %v334 = vcvt.s32.f32 %v332
        %335 = vmin.xlane.f32.xlu0 %v334
        %v336 = vpop.xlane.xlu0 %335
        %vm337 = vcmp.eq.f32.partialorder %v334, %v336
        %v338 = vsel %vm337, %v333, inf
        %339 = vmin.xlane.f32.xlu0 %v338
        %v340 = vpop.xlane.xlu0 %339
        %v341 = vcvt.f32.s32 %v340
        %v342 = vcvt.f32.s32 %v336
        %v343 = vshll.u32 %v342, 16
        %v344 = vadd.s32 %v343, %v341
        %v345 = vmul.f32 %v308, %v306
        %v346 = vmul.f32 %v328, %v306
        %v347 = vadd.f32 %v345, %v346
        %v348 = vadd.f32 %v347, 1e-20
        %v349 = vrcp.pop %v348
        %v350 = vmul.f32 %v345, %v349
        %v351 = vmul.f32 %v346, %v349
        %vm352 = vcmp.eq.s32.totalorder %v295, 0
        %v353 = vsel %vm352, %v350, 0.0
        %vm354 = vcmp.eq.s32.totalorder %v295, 2
        %v355 = vcvt.s32.f32 %v324
        %v356 = vsel %vm354, %v355, %v353
        %vm357 = vcmp.eq.s32.totalorder %v295, 1
        %v358 = vsel %vm357, %v351, %v356
        %vm359 = vcmp.eq.s32.totalorder %v295, 3
        %v360 = vcvt.s32.f32 %v344
        %v361 = vsel %vm359, %v360, %v358
        %362 = vst [vmem:[%s223] sm:$0xff] %v361
        %v363 = vmul.f32 %v302, %v306
        %v364 = vrot.slane %v363, 4
        %v365 = vadd.f32 %v363, %v364
        %v366 = vrot.slane %v365, 2
        %v367 = vadd.f32 %v365, %v366
        %v368 = vrot.slane %v367, 1
        %v369 = vadd.f32 %v367, %v368
        %370 = vst [vmem:[%s230] sm:$0xff] %v369
        %s371 = sand.u32 %s96, 1
        %s372 = scalar_lea.sflag [#allocation4], %s371
        %s373 = sand.u32 %s96, 1
        %s374 = smul.addr %s373, 8
        %s375 = scalar_lea.vmem [#allocation7], %s374
        %s376 = sand.u32 %s124, 1
        %s377 = scalar_lea.sflag [#allocation9], %s376
        %s378 = sand.u32 %s124, 1
        %s379 = smul.addr %s378, 8
        %s380 = scalar_lea.vmem [#allocation8], %s379
        // Predicated region
        $region37: #{tpu_custom_call.1} parent=27 // pred_check
          %p381 = pneg %p106
        $region38: #{tpu_custom_call.1} parent=27 // pred_check_branch
          %383 = sbr.rel (%p381) target = $region40
        $region39: #{tpu_custom_call.1} parent=27 // pred_region
          %s385 = ssub.s32 128, 128
          %386 = vsyncadd %s372, %s385
          %s387 = sadd.s32 %s30, %s29
          %s388 = smul.addr %s387, 128
          %s389 = scalar_lea.hbm %s2, %s388
          %s391 = sshll.u32 %s375, 4
          %s392 = int_to_ptr.vmem [resolvable:$true] %s391
          %394 = dma.vmem_to_hbm [thread:$0]  %s392, 128, %s389, %s372
        $region40: #{tpu_custom_call.1} parent=27 // pred_fallthru
          _
        // Predicated region
        $region41: #{tpu_custom_call.1} parent=27 // pred_check
          %p395 = pneg %p134
        $region42: #{tpu_custom_call.1} parent=27 // pred_check_branch
          %397 = sbr.rel (%p395) target = $region44
        $region43: #{tpu_custom_call.1} parent=27 // pred_region
          %s399 = ssub.s32 128, 128
          %400 = vsyncadd %s377, %s399
          %s401 = sadd.s32 %s30, %s29
          %s402 = smul.addr %s401, 128
          %s403 = scalar_lea.hbm %s3, %s402
          %s405 = sshll.u32 %s380, 4
          %s406 = int_to_ptr.vmem [resolvable:$true] %s405
          %408 = dma.vmem_to_hbm [thread:$0]  %s406, 128, %s403, %s377
        $region44: #{tpu_custom_call.1} parent=27 // pred_fallthru
          _
      $region28: #{tpu_custom_call.1} parent=5 // pred_fallthru
        _
      %p409 = scmp.le.s32.totalorder 2, %s20
      // Predicated region
      $region45: #{tpu_custom_call.1} parent=5 // pred_check
        %p410 = pneg %p409
      $region46: #{tpu_custom_call.1} parent=5 // pred_check_branch
        %412 = sbr.rel (%p410) target = $region48
      $region47: #{tpu_custom_call.1} parent=5 // pred_region
        %s413 = ssub.s32 %s20, 2
        // Predicated region
        $region49: #{tpu_custom_call.1} parent=47 // pred_check
          %p414 = pneg %p112
        $region50: #{tpu_custom_call.1} parent=47 // pred_check_branch
          %416 = sbr.rel (%p414) target = $region52
        $region51: #{tpu_custom_call.1} parent=47 // pred_region
          %s417 = sand.u32 %s97, 1
          %s418 = scalar_lea.sflag [#allocation4], %s417
          %s419 = sand.u32 %s97, 1
          %s420 = smul.addr %s419, 8
          %s421 = scalar_lea.vmem [#allocation7], %s420
          %422 = dma.done %s418, 128
        $region52: #{tpu_custom_call.1} parent=47 // pred_fallthru
          _
        // Predicated region
        $region53: #{tpu_custom_call.1} parent=47 // pred_check
          %p423 = pneg %p140
        $region54: #{tpu_custom_call.1} parent=47 // pred_check_branch
          %425 = sbr.rel (%p423) target = $region56
        $region55: #{tpu_custom_call.1} parent=47 // pred_region
          %s426 = sand.u32 %s125, 1
          %s427 = scalar_lea.sflag [#allocation9], %s426
          %s428 = sand.u32 %s125, 1
          %s429 = smul.addr %s428, 8
          %s430 = scalar_lea.vmem [#allocation8], %s429
          %431 = dma.done %s427, 128
        $region56: #{tpu_custom_call.1} parent=47 // pred_fallthru
          _
      $region48: #{tpu_custom_call.1} parent=5 // pred_fallthru
        _
    $region6: #{tpu_custom_call.1} parent=1 // loop_footer
      %s24 = sadd.s32 1, %s20
    $region7: #{tpu_custom_call.1} parent=1 // loop_footer_branch
      %19 = sbr.rel target = $region3
    $region8: #{tpu_custom_call.1} parent=1 // loop_exit
      _
    %432 = vsyncpa [#allocation3], 1
    %s433 = scalar_lea.sflag [#allocation3], 1
    %434 = vsyncpa %s433, 1
    %435 = vsyncpa [#allocation6], 1
    %436 = vsyncpa [#allocation4], 1
    %s437 = scalar_lea.sflag [#allocation4], 1
    %438 = vsyncpa %s437, 1
    %439 = vsyncpa [#allocation9], 1
    %s440 = scalar_lea.sflag [#allocation9], 1
    %441 = vsyncpa %s440, 1

</llo_original>
